<compile_context>
chip_gen: v5e
topology: v5e:2x2
jax: 0.10.0
libtpu: 0.0.40
codegen_flags: <defaults>
</compile_context>

<pallas_src>
import jax
import jax.numpy as jnp
from jax.experimental import pallas as pl
from jax.experimental.pallas import tpu as pltpu

LANE = 128
SUBLANE = 8


def _round_up(n, m):
    return ((n + m - 1) // m) * m


def _make_kernel(matmul_dtype):
    def kernel(x_ref,
               w1, b1, w2, b2, w3, b3, w4, b4, w5, b5,
               o_ref):
        # MXU inputs cast to `matmul_dtype`; accumulation + bias / ReLU / tanh
        # in f32 (bias refs stay f32).
        def layer(h, w_ref, b_ref):
            return jnp.dot(h.astype(matmul_dtype), w_ref[...],
                           preferred_element_type=jnp.float32) + b_ref[...]

        h = x_ref[...]
        h = jnp.maximum(layer(h, w1, b1), 0.0)
        h = jnp.maximum(layer(h, w2, b2), 0.0)
        h = jnp.maximum(layer(h, w3, b3), 0.0)
        h = jnp.maximum(layer(h, w4, b4), 0.0)
        o_ref[...] = jnp.tanh(layer(h, w5, b5)).astype(o_ref.dtype)

    return kernel


def encoder_onehot(x, params, *, tb=512, matmul_dtype=jnp.float32):
    """x: [B, data_dim] float32. params: dict of weights/biases ([in,out] layout).

    Returns [B, hidden_dim] float32. Use matmul_dtype=jnp.bfloat16 on v6e/v7x
    for ~2x MXU throughput (expect ~1e-2 relative error).
    """
    B, data_dim = x.shape
    hidden_dim = params["w5"].shape[1]
    tb = _round_up(max(tb, SUBLANE), SUBLANE)

    # ---- lane-dense padding of layer widths ------------------------------
    h1 = params["w1"].shape[1]             # 64 in the reference module
    h1p = _round_up(h1, LANE)              # -> 128
    outp = _round_up(hidden_dim, LANE)     # lane-dense output block

    def pad_cols(a, cols):
        return jnp.pad(a, ((0, 0), (0, cols - a.shape[1])))

    def pad_rows(a, rows):
        return jnp.pad(a, ((0, rows - a.shape[0]), (0, 0)))

    # Padded weight cols / bias entries are exactly zero, so padded lanes stay
    # zero through ReLU and contribute nothing downstream (w2 padded rows = 0).
    w1 = pad_cols(params["w1"], h1p)
    b1 = pad_cols(params["b1"], h1p)
    w2 = pad_rows(params["w2"], h1p)
    b2 = params["b2"]
    w3, b3 = params["w3"], params["b3"]
    w4, b4 = params["w4"], params["b4"]
    w5 = pad_cols(params["w5"], outp)
    b5 = pad_cols(params["b5"], outp)

    weights = [w.astype(matmul_dtype) for w in (w1, w2, w3, w4, w5)]
    biases = [b.astype(jnp.float32) for b in (b1, b2, b3, b4, b5)]

    # ---- batch padding / tiling -------------------------------------------
    Bp = _round_up(B, SUBLANE)
    if Bp <= tb:
        tb_eff = Bp                        # whole batch in one grid step
    else:
        tb_eff = tb
        Bp = _round_up(B, tb_eff)
    if Bp != B:
        x = jnp.pad(x, ((0, Bp - B), (0, 0)))

    grid = (Bp // tb_eff,)

    def full_spec(shape):
        # Whole (tiny) array resident every grid step; constant index_map
        # means it is not re-DMA'd across iterations.
        return pl.BlockSpec(shape, lambda i: (0, 0))

    in_specs = [pl.BlockSpec((tb_eff, data_dim), lambda i: (i, 0))]
    flat_args = []
    for w, b in zip(weights, biases):
        in_specs.append(full_spec(w.shape))
        in_specs.append(full_spec(b.shape))
        flat_args += [w, b]

    out_spec = pl.BlockSpec((tb_eff, outp), lambda i: (i, 0))

    flops = 2 * Bp * sum(w.shape[0] * w.shape[1] for w in weights)
    bytes_accessed = (
        Bp * data_dim * 4
        + sum(int(w.size) * w.dtype.itemsize for w in weights)
        + sum(int(b.size) * b.dtype.itemsize for b in biases)
        + Bp * outp * 4)
    cost = pl.CostEstimate(flops=flops,
                           transcendentals=Bp * outp,      # tanh
                           bytes_accessed=bytes_accessed)

    out = pl.pallas_call(
        _make_kernel(matmul_dtype),
        out_shape=jax.ShapeDtypeStruct((Bp, outp), jnp.float32),
        grid_spec=pltpu.PrefetchScalarGridSpec(
            num_scalar_prefetch=0,
            grid=grid,
            in_specs=in_specs,
            out_specs=out_spec,
        ),
        compiler_params=pltpu.CompilerParams(
            dimension_semantics=("parallel",)),
        cost_estimate=cost,
    )(x, *flat_args)

    return out[:B, :hidden_dim]


def init_params(key, data_dim, hidden_dim):
    """Deterministic synthetic init (uniform +-1/sqrt(fan_in), torch default-ish)."""
    dims = [data_dim, 2 ** 6, 2 ** 7, 2 ** 7, 2 ** 7, hidden_dim]
    params = {}
    for li in range(5):
        fan_in, fan_out = dims[li], dims[li + 1]
        key, kw, kb = jax.random.split(key, 3)
        bound = 1.0 / jnp.sqrt(fan_in)
        # Stored as [in, out] (pre-transposed relative to torch's [out, in]).
        params[f"w{li + 1}"] = jax.random.uniform(
            kw, (fan_in, fan_out), jnp.float32, -bound, bound)
        params[f"b{li + 1}"] = jax.random.uniform(
            kb, (1, fan_out), jnp.float32, -bound, bound)
    return params


def encoder_onehot_ref(x, params):
    """Pure-JAX reference for correctness checking."""
    h = x
    for li in range(1, 5):
        h = jnp.maximum(h @ params[f"w{li}"] + params[f"b{li}"], 0.0)
    return jnp.tanh(h @ params["w5"] + params["b5"])


if __name__ == "__main__":
    key = jax.random.PRNGKey(0)
    data_dim, hidden_dim = 32, 32

    kx, kp, kx2 = jax.random.split(key, 3)
    params = init_params(kp, data_dim, hidden_dim)

    # Batch that is a multiple of 8 (single grid step, lane-dense everything).
    x = jax.random.normal(kx, (16, data_dim), jnp.float32)
    out = jax.block_until_ready(encoder_onehot(x, params))
    ref = encoder_onehot_ref(x, params)
    assert out.shape == (16, hidden_dim)
    assert jnp.allclose(out, ref, atol=1e-3, rtol=1e-3), "f32 mismatch vs reference"

    # Arbitrary batch size (zero-padded internally, result sliced back).
    x2 = jax.random.normal(kx2, (10, data_dim), jnp.float32)
    out2 = jax.block_until_ready(encoder_onehot(x2, params))
    ref2 = encoder_onehot_ref(x2, params)
    assert out2.shape == (10, hidden_dim)
    assert jnp.allclose(out2, ref2, atol=1e-3, rtol=1e-3), "padded-batch mismatch"

    # bf16 MXU-input path (recommended on v6e/v7x); loose tolerance expected.
    out_bf16 = jax.block_until_ready(
        encoder_onehot(x, params, matmul_dtype=jnp.bfloat16))
    assert out_bf16.shape == (16, hidden_dim)
    assert bool(jnp.all(jnp.isfinite(out_bf16)))
    assert jnp.allclose(out_bf16, ref, atol=1e-1), "bf16 mismatch vs reference"

    print("KERNEL_OK")
</pallas_src>

<mosaic_0001>
module attributes {stable_mosaic.version = 11 : i64} {
  func.func @kernel(%arg0: i32, %arg1: memref<16x32xf32, #tpu.memory_space<vmem>>, %arg2: memref<32x128xf32, #tpu.memory_space<vmem>>, %arg3: memref<1x128xf32, #tpu.memory_space<vmem>>, %arg4: memref<128x128xf32, #tpu.memory_space<vmem>>, %arg5: memref<1x128xf32, #tpu.memory_space<vmem>>, %arg6: memref<128x128xf32, #tpu.memory_space<vmem>>, %arg7: memref<1x128xf32, #tpu.memory_space<vmem>>, %arg8: memref<128x128xf32, #tpu.memory_space<vmem>>, %arg9: memref<1x128xf32, #tpu.memory_space<vmem>>, %arg10: memref<128x128xf32, #tpu.memory_space<vmem>>, %arg11: memref<1x128xf32, #tpu.memory_space<vmem>>, %arg12: memref<16x128xf32, #tpu.memory_space<vmem>>) attributes {dimension_semantics = [#tpu.dimension_semantics<parallel>], iteration_bounds = array<i64: 1>, scalar_prefetch = 0 : i64, scratch_operands = 0 : i64, tpu.core_type = #tpu.core_type<tc>, window_params = [{transform_indices = @transform_0, window_bounds = array<i64: 16, 32>}, {pipeline_mode = #tpu.pipeline_mode<synchronous>, transform_indices = @transform_1, window_bounds = array<i64: 32, 128>}, {pipeline_mode = #tpu.pipeline_mode<synchronous>, transform_indices = @transform_2, window_bounds = array<i64: 1, 128>}, {pipeline_mode = #tpu.pipeline_mode<synchronous>, transform_indices = @transform_3, window_bounds = array<i64: 128, 128>}, {pipeline_mode = #tpu.pipeline_mode<synchronous>, transform_indices = @transform_4, window_bounds = array<i64: 1, 128>}, {pipeline_mode = #tpu.pipeline_mode<synchronous>, transform_indices = @transform_5, window_bounds = array<i64: 128, 128>}, {pipeline_mode = #tpu.pipeline_mode<synchronous>, transform_indices = @transform_6, window_bounds = array<i64: 1, 128>}, {pipeline_mode = #tpu.pipeline_mode<synchronous>, transform_indices = @transform_7, window_bounds = array<i64: 128, 128>}, {pipeline_mode = #tpu.pipeline_mode<synchronous>, transform_indices = @transform_8, window_bounds = array<i64: 1, 128>}, {pipeline_mode = #tpu.pipeline_mode<synchronous>, transform_indices = @transform_9, window_bounds = array<i64: 128, 128>}, {pipeline_mode = #tpu.pipeline_mode<synchronous>, transform_indices = @transform_10, window_bounds = array<i64: 1, 128>}, {transform_indices = @transform_11, window_bounds = array<i64: 16, 128>}]} {
    %c0 = arith.constant 0 : index
    %c0_0 = arith.constant 0 : index
    %0 = vector.load %arg1[%c0, %c0_0] : memref<16x32xf32, #tpu.memory_space<vmem>>, vector<16x32xf32>
    %c0_1 = arith.constant 0 : index
    %c0_2 = arith.constant 0 : index
    %1 = vector.load %arg2[%c0_1, %c0_2] : memref<32x128xf32, #tpu.memory_space<vmem>>, vector<32x128xf32>
    %cst = arith.constant dense<0.000000e+00> : vector<16x128xf32>
    %2 = tpu.matmul %0, %1, %cst {dimension_numbers = #tpu.dot_dimension_numbers<[1], [0], [0], [1], [0, 0, 1, 1], [], []>} : vector<16x32xf32>, vector<32x128xf32>, vector<16x128xf32> -> vector<16x128xf32>
    %c0_3 = arith.constant 0 : index
    %c0_4 = arith.constant 0 : index
    %3 = vector.load %arg3[%c0_3, %c0_4] : memref<1x128xf32, #tpu.memory_space<vmem>>, vector<1x128xf32>
    %4 = vector.broadcast %3 : vector<1x128xf32> to vector<16x128xf32>
    %5 = arith.addf %2, %4 : vector<16x128xf32>
    %cst_5 = arith.constant 0.000000e+00 : f32
    %6 = vector.broadcast %cst_5 : f32 to vector<16x128xf32>
    %7 = arith.maximumf %5, %6 : vector<16x128xf32>
    %c0_6 = arith.constant 0 : index
    %c0_7 = arith.constant 0 : index
    %8 = vector.load %arg4[%c0_6, %c0_7] : memref<128x128xf32, #tpu.memory_space<vmem>>, vector<128x128xf32>
    %cst_8 = arith.constant dense<0.000000e+00> : vector<16x128xf32>
    %9 = tpu.matmul %7, %8, %cst_8 {dimension_numbers = #tpu.dot_dimension_numbers<[1], [0], [0], [1], [0, 0, 1, 1], [], []>} : vector<16x128xf32>, vector<128x128xf32>, vector<16x128xf32> -> vector<16x128xf32>
    %c0_9 = arith.constant 0 : index
    %c0_10 = arith.constant 0 : index
    %10 = vector.load %arg5[%c0_9, %c0_10] : memref<1x128xf32, #tpu.memory_space<vmem>>, vector<1x128xf32>
    %11 = vector.broadcast %10 : vector<1x128xf32> to vector<16x128xf32>
    %12 = arith.addf %9, %11 : vector<16x128xf32>
    %cst_11 = arith.constant 0.000000e+00 : f32
    %13 = vector.broadcast %cst_11 : f32 to vector<16x128xf32>
    %14 = arith.maximumf %12, %13 : vector<16x128xf32>
    %c0_12 = arith.constant 0 : index
    %c0_13 = arith.constant 0 : index
    %15 = vector.load %arg6[%c0_12, %c0_13] : memref<128x128xf32, #tpu.memory_space<vmem>>, vector<128x128xf32>
    %cst_14 = arith.constant dense<0.000000e+00> : vector<16x128xf32>
    %16 = tpu.matmul %14, %15, %cst_14 {dimension_numbers = #tpu.dot_dimension_numbers<[1], [0], [0], [1], [0, 0, 1, 1], [], []>} : vector<16x128xf32>, vector<128x128xf32>, vector<16x128xf32> -> vector<16x128xf32>
    %c0_15 = arith.constant 0 : index
    %c0_16 = arith.constant 0 : index
    %17 = vector.load %arg7[%c0_15, %c0_16] : memref<1x128xf32, #tpu.memory_space<vmem>>, vector<1x128xf32>
    %18 = vector.broadcast %17 : vector<1x128xf32> to vector<16x128xf32>
    %19 = arith.addf %16, %18 : vector<16x128xf32>
    %cst_17 = arith.constant 0.000000e+00 : f32
    %20 = vector.broadcast %cst_17 : f32 to vector<16x128xf32>
    %21 = arith.maximumf %19, %20 : vector<16x128xf32>
    %c0_18 = arith.constant 0 : index
    %c0_19 = arith.constant 0 : index
    %22 = vector.load %arg8[%c0_18, %c0_19] : memref<128x128xf32, #tpu.memory_space<vmem>>, vector<128x128xf32>
    %cst_20 = arith.constant dense<0.000000e+00> : vector<16x128xf32>
    %23 = tpu.matmul %21, %22, %cst_20 {dimension_numbers = #tpu.dot_dimension_numbers<[1], [0], [0], [1], [0, 0, 1, 1], [], []>} : vector<16x128xf32>, vector<128x128xf32>, vector<16x128xf32> -> vector<16x128xf32>
    %c0_21 = arith.constant 0 : index
    %c0_22 = arith.constant 0 : index
    %24 = vector.load %arg9[%c0_21, %c0_22] : memref<1x128xf32, #tpu.memory_space<vmem>>, vector<1x128xf32>
    %25 = vector.broadcast %24 : vector<1x128xf32> to vector<16x128xf32>
    %26 = arith.addf %23, %25 : vector<16x128xf32>
    %cst_23 = arith.constant 0.000000e+00 : f32
    %27 = vector.broadcast %cst_23 : f32 to vector<16x128xf32>
    %28 = arith.maximumf %26, %27 : vector<16x128xf32>
    %c0_24 = arith.constant 0 : index
    %c0_25 = arith.constant 0 : index
    %29 = vector.load %arg10[%c0_24, %c0_25] : memref<128x128xf32, #tpu.memory_space<vmem>>, vector<128x128xf32>
    %cst_26 = arith.constant dense<0.000000e+00> : vector<16x128xf32>
    %30 = tpu.matmul %28, %29, %cst_26 {dimension_numbers = #tpu.dot_dimension_numbers<[1], [0], [0], [1], [0, 0, 1, 1], [], []>} : vector<16x128xf32>, vector<128x128xf32>, vector<16x128xf32> -> vector<16x128xf32>
    %c0_27 = arith.constant 0 : index
    %c0_28 = arith.constant 0 : index
    %31 = vector.load %arg11[%c0_27, %c0_28] : memref<1x128xf32, #tpu.memory_space<vmem>>, vector<1x128xf32>
    %32 = vector.broadcast %31 : vector<1x128xf32> to vector<16x128xf32>
    %33 = arith.addf %30, %32 : vector<16x128xf32>
    %34 = math.tanh %33 : vector<16x128xf32>
    %c0_29 = arith.constant 0 : index
    %c0_30 = arith.constant 0 : index
    %35 = vector.load %arg12[%c0_29, %c0_30] : memref<16x128xf32, #tpu.memory_space<vmem>>, vector<16x128xf32>
    tpu.vector_store %arg12[%c0_29, %c0_30], %34 {strides = array<i32>} : memref<16x128xf32, #tpu.memory_space<vmem>>, vector<16x128xf32>,
    return
  }
  func.func @transform_0(%arg0: i32) -> (i32, i32) {
    %c0_i32 = arith.constant 0 : i32
    %c0_i32_0 = arith.constant 0 : i32
    return %arg0, %c0_i32 : i32, i32
  }
  func.func @transform_1(%arg0: i32) -> (i32, i32) {
    %c0_i32 = arith.constant 0 : i32
    %c0_i32_0 = arith.constant 0 : i32
    %c0_i32_1 = arith.constant 0 : i32
    return %c0_i32, %c0_i32_0 : i32, i32
  }
  func.func @transform_2(%arg0: i32) -> (i32, i32) {
    %c0_i32 = arith.constant 0 : i32
    %c0_i32_0 = arith.constant 0 : i32
    %c0_i32_1 = arith.constant 0 : i32
    return %c0_i32, %c0_i32_0 : i32, i32
  }
  func.func @transform_3(%arg0: i32) -> (i32, i32) {
    %c0_i32 = arith.constant 0 : i32
    %c0_i32_0 = arith.constant 0 : i32
    %c0_i32_1 = arith.constant 0 : i32
    return %c0_i32, %c0_i32_0 : i32, i32
  }
  func.func @transform_4(%arg0: i32) -> (i32, i32) {
    %c0_i32 = arith.constant 0 : i32
    %c0_i32_0 = arith.constant 0 : i32
    %c0_i32_1 = arith.constant 0 : i32
    return %c0_i32, %c0_i32_0 : i32, i32
  }
  func.func @transform_5(%arg0: i32) -> (i32, i32) {
    %c0_i32 = arith.constant 0 : i32
    %c0_i32_0 = arith.constant 0 : i32
    %c0_i32_1 = arith.constant 0 : i32
    return %c0_i32, %c0_i32_0 : i32, i32
  }
  func.func @transform_6(%arg0: i32) -> (i32, i32) {
    %c0_i32 = arith.constant 0 : i32
    %c0_i32_0 = arith.constant 0 : i32
    %c0_i32_1 = arith.constant 0 : i32
    return %c0_i32, %c0_i32_0 : i32, i32
  }
  func.func @transform_7(%arg0: i32) -> (i32, i32) {
    %c0_i32 = arith.constant 0 : i32
    %c0_i32_0 = arith.constant 0 : i32
    %c0_i32_1 = arith.constant 0 : i32
    return %c0_i32, %c0_i32_0 : i32, i32
  }
  func.func @transform_8(%arg0: i32) -> (i32, i32) {
    %c0_i32 = arith.constant 0 : i32
    %c0_i32_0 = arith.constant 0 : i32
    %c0_i32_1 = arith.constant 0 : i32
    return %c0_i32, %c0_i32_0 : i32, i32
  }
  func.func @transform_9(%arg0: i32) -> (i32, i32) {
    %c0_i32 = arith.constant 0 : i32
    %c0_i32_0 = arith.constant 0 : i32
    %c0_i32_1 = arith.constant 0 : i32
    return %c0_i32, %c0_i32_0 : i32, i32
  }
  func.func @transform_10(%arg0: i32) -> (i32, i32) {
    %c0_i32 = arith.constant 0 : i32
    %c0_i32_0 = arith.constant 0 : i32
    %c0_i32_1 = arith.constant 0 : i32
    return %c0_i32, %c0_i32_0 : i32, i32
  }
  func.func @transform_11(%arg0: i32) -> (i32, i32) {
    %c0_i32 = arith.constant 0 : i32
    %c0_i32_0 = arith.constant 0 : i32
    return %arg0, %c0_i32 : i32, i32
  }
}

</mosaic_0001>

<llo_original>
// kernel: tpu_custom_call.1
$region0: #{tpu_custom_call.1}
  #allocation0 [shape = 'u32[]', space=smem, size = 0x4, offset = 0x4, fixed_abs, tag = 'smem constant byte address 0x4 - core index']
  #allocation1 [shape = 'u32[72,128]{1,0:T(1,128)}', space=vmem, size = 0x9000, scoped, tag = 'internal scratch']
  %s0 = inlined_call_operand.hbm [shape: f32[16,32], index: 0, kind: input, shape index: {}]
  %s1 = inlined_call_operand.hbm [shape: f32[32,128], index: 1, kind: input, shape index: {}]
  %s2 = inlined_call_operand.vmem [shape: f32[1,128], index: 2, kind: input, shape index: {}]
  %s3 = inlined_call_operand.hbm [shape: f32[128,128], index: 3, kind: input, shape index: {}]
  %s4 = inlined_call_operand.vmem [shape: f32[1,128], index: 4, kind: input, shape index: {}]
  %s5 = inlined_call_operand.hbm [shape: f32[128,128], index: 5, kind: input, shape index: {}]
  %s6 = inlined_call_operand.vmem [shape: f32[1,128], index: 6, kind: input, shape index: {}]
  %s7 = inlined_call_operand.hbm [shape: f32[128,128], index: 7, kind: input, shape index: {}]
  %s8 = inlined_call_operand.vmem [shape: f32[1,128], index: 8, kind: input, shape index: {}]
  %s9 = inlined_call_operand.hbm [shape: f32[128,128], index: 9, kind: input, shape index: {}]
  %s10 = inlined_call_operand.vmem [shape: f32[1,128], index: 10, kind: input, shape index: {}]
  %s11 = inlined_call_operand.hbm [shape: f32[16,128], index: 11, kind: output, shape index: {}]
  %s12 = sld [smem:[#allocation0]]
  $region78: #{tpu_custom_call.1} parent=0
    _
  %s14 = ssub.s32 1, %s12
  %s15 = scalar_select 0, %s14, %s12
  $region1: #{tpu_custom_call.1} parent=0
    #allocation2 [shape = 'u8[8192]{0}', space=vmem, size = 0x2000, scoped, tag = 'input window, operand 0, single buffered']
    #allocation3 [shape = 's32[1]{0}', space=sflag, size = 0x4, scoped, tag = 'scoped memory for tpu_custom_call.1']
    #allocation4 [shape = 's32[1]{0}', space=sflag, size = 0x4, scoped, tag = 'scoped memory for tpu_custom_call.1']
    #allocation5 [shape = 'u8[16384]{0}', space=vmem, size = 0x4000, scoped, tag = 'input window, operand 1, single buffered']
    #allocation6 [shape = 's32[1]{0}', space=sflag, size = 0x4, scoped, tag = 'scoped memory for tpu_custom_call.1']
    #allocation7 [shape = 'u8[65536]{0}', space=vmem, size = 0x10000, scoped, tag = 'input window, operand 3, single buffered']
    #allocation8 [shape = 'u8[65536]{0}', space=vmem, size = 0x10000, scoped, tag = 'input window, operand 5, single buffered']
    #allocation9 [shape = 's32[1]{0}', space=sflag, size = 0x4, scoped, tag = 'scoped memory for tpu_custom_call.1']
    #allocation10 [shape = 'u8[65536]{0}', space=vmem, size = 0x10000, scoped, tag = 'input window, operand 7, single buffered']
    #allocation11 [shape = 'u8[65536]{0}', space=vmem, size = 0x10000, scoped, tag = 'input window, operand 9, single buffered']
    #allocation12 [shape = 's32[1]{0}', space=sflag, size = 0x4, scoped, tag = 'scoped memory for tpu_custom_call.1']
    #allocation13 [shape = 'u8[8192]{0}', space=vmem, size = 0x2000, scoped, tag = 'output window, operand 0, single buffered']
    %16 = vsyncpa [#allocation3], 0
    %17 = vsyncpa [#allocation6], 0
    %18 = vsyncpa [#allocation9], 0
    %19 = vsyncpa [#allocation12], 0
    %20 = vsyncpa [#allocation4], 0
    // Predicated region
    $region2: #{tpu_custom_call.1} parent=1 // pred_check
      _
    $region3: #{tpu_custom_call.1} parent=1 // pred_check_branch
      %22 = sbr.rel (0) target = $region5
    $region4: #{tpu_custom_call.1} parent=1 // pred_region
      %24 = vsyncadd [#allocation3], 0
      %s25 = sshll.u32 %s0, 4
      %s26 = int_to_ptr.hbm [resolvable:$true] %s25
      %s27 = sshll.u32 [#allocation2], 4
      %s28 = int_to_ptr.vmem [resolvable:$true] %s27
      %33 = dma.hbm_to_vmem [thread:$0]  %s26, 256, %s28, [#allocation3], 128, 128, 8
    $region5: #{tpu_custom_call.1} parent=1 // pred_fallthru
      _
    // Predicated region
    $region6: #{tpu_custom_call.1} parent=1 // pred_check
      _
    $region7: #{tpu_custom_call.1} parent=1 // pred_check_branch
      %35 = sbr.rel (0) target = $region9
    $region8: #{tpu_custom_call.1} parent=1 // pred_region
      %37 = vsyncadd [#allocation6], 0
      %s38 = sshll.u32 %s1, 4
      %s39 = int_to_ptr.hbm [resolvable:$true] %s38
      %s40 = sshll.u32 [#allocation5], 4
      %s41 = int_to_ptr.vmem [resolvable:$true] %s40
      %46 = dma.hbm_to_vmem [thread:$0]  %s39, 512, %s41, [#allocation6], 128, 128, 8
    $region9: #{tpu_custom_call.1} parent=1 // pred_fallthru
      _
    // Predicated region
    $region10: #{tpu_custom_call.1} parent=1 // pred_check
      _
    $region11: #{tpu_custom_call.1} parent=1 // pred_check_branch
      %48 = sbr.rel (0) target = $region13
    $region12: #{tpu_custom_call.1} parent=1 // pred_region
      _
    $region13: #{tpu_custom_call.1} parent=1 // pred_fallthru
      _
    // Predicated region
    $region14: #{tpu_custom_call.1} parent=1 // pred_check
      _
    $region15: #{tpu_custom_call.1} parent=1 // pred_check_branch
      %50 = sbr.rel (0) target = $region17
    $region16: #{tpu_custom_call.1} parent=1 // pred_region
      %52 = vsyncadd [#allocation6], 0
      %s53 = sshll.u32 %s3, 4
      %s54 = int_to_ptr.hbm [resolvable:$true] %s53
      %s55 = sshll.u32 [#allocation7], 4
      %s56 = int_to_ptr.vmem [resolvable:$true] %s55
      %61 = dma.hbm_to_vmem [thread:$0]  %s54, 2048, %s56, [#allocation6], 128, 128, 8
    $region17: #{tpu_custom_call.1} parent=1 // pred_fallthru
      _
    // Predicated region
    $region18: #{tpu_custom_call.1} parent=1 // pred_check
      _
    $region19: #{tpu_custom_call.1} parent=1 // pred_check_branch
      %63 = sbr.rel (0) target = $region21
    $region20: #{tpu_custom_call.1} parent=1 // pred_region
      _
    $region21: #{tpu_custom_call.1} parent=1 // pred_fallthru
      _
    // Predicated region
    $region22: #{tpu_custom_call.1} parent=1 // pred_check
      _
    $region23: #{tpu_custom_call.1} parent=1 // pred_check_branch
      %65 = sbr.rel (0) target = $region25
    $region24: #{tpu_custom_call.1} parent=1 // pred_region
      %67 = vsyncadd [#allocation9], 0
      %s68 = sshll.u32 %s5, 4
      %s69 = int_to_ptr.hbm [resolvable:$true] %s68
      %s70 = sshll.u32 [#allocation8], 4
      %s71 = int_to_ptr.vmem [resolvable:$true] %s70
      %76 = dma.hbm_to_vmem [thread:$0]  %s69, 2048, %s71, [#allocation9], 128, 128, 8
    $region25: #{tpu_custom_call.1} parent=1 // pred_fallthru
      _
    // Predicated region
    $region26: #{tpu_custom_call.1} parent=1 // pred_check
      _
    $region27: #{tpu_custom_call.1} parent=1 // pred_check_branch
      %78 = sbr.rel (0) target = $region29
    $region28: #{tpu_custom_call.1} parent=1 // pred_region
      _
    $region29: #{tpu_custom_call.1} parent=1 // pred_fallthru
      _
    // Predicated region
    $region30: #{tpu_custom_call.1} parent=1 // pred_check
      _
    $region31: #{tpu_custom_call.1} parent=1 // pred_check_branch
      %80 = sbr.rel (0) target = $region33
    $region32: #{tpu_custom_call.1} parent=1 // pred_region
      %82 = vsyncadd [#allocation9], 0
      %s83 = sshll.u32 %s7, 4
      %s84 = int_to_ptr.hbm [resolvable:$true] %s83
      %s85 = sshll.u32 [#allocation10], 4
      %s86 = int_to_ptr.vmem [resolvable:$true] %s85
      %91 = dma.hbm_to_vmem [thread:$0]  %s84, 2048, %s86, [#allocation9], 128, 128, 8
    $region33: #{tpu_custom_call.1} parent=1 // pred_fallthru
      _
    // Predicated region
    $region34: #{tpu_custom_call.1} parent=1 // pred_check
      _
    $region35: #{tpu_custom_call.1} parent=1 // pred_check_branch
      %93 = sbr.rel (0) target = $region37
    $region36: #{tpu_custom_call.1} parent=1 // pred_region
      _
    $region37: #{tpu_custom_call.1} parent=1 // pred_fallthru
      _
    // Predicated region
    $region38: #{tpu_custom_call.1} parent=1 // pred_check
      _
    $region39: #{tpu_custom_call.1} parent=1 // pred_check_branch
      %95 = sbr.rel (0) target = $region41
    $region40: #{tpu_custom_call.1} parent=1 // pred_region
      %97 = vsyncadd [#allocation12], 0
      %s98 = sshll.u32 %s9, 4
      %s99 = int_to_ptr.hbm [resolvable:$true] %s98
      %s100 = sshll.u32 [#allocation11], 4
      %s101 = int_to_ptr.vmem [resolvable:$true] %s100
      %106 = dma.hbm_to_vmem [thread:$0]  %s99, 2048, %s101, [#allocation12], 128, 128, 8
    $region41: #{tpu_custom_call.1} parent=1 // pred_fallthru
      _
    // Predicated region
    $region42: #{tpu_custom_call.1} parent=1 // pred_check
      _
    $region43: #{tpu_custom_call.1} parent=1 // pred_check_branch
      %108 = sbr.rel (0) target = $region45
    $region44: #{tpu_custom_call.1} parent=1 // pred_region
      _
    $region45: #{tpu_custom_call.1} parent=1 // pred_fallthru
      _
    // Predicated region
    $region46: #{tpu_custom_call.1} parent=1 // pred_check
      _
    $region47: #{tpu_custom_call.1} parent=1 // pred_check_branch
      %110 = sbr.rel (0) target = $region49
    $region48: #{tpu_custom_call.1} parent=1 // pred_region
      %112 = dma.done [#allocation3], 256
    $region49: #{tpu_custom_call.1} parent=1 // pred_fallthru
      _
    // Predicated region
    $region50: #{tpu_custom_call.1} parent=1 // pred_check
      _
    $region51: #{tpu_custom_call.1} parent=1 // pred_check_branch
      %114 = sbr.rel (0) target = $region53
    $region52: #{tpu_custom_call.1} parent=1 // pred_region
      %116 = dma.done [#allocation6], 512
    $region53: #{tpu_custom_call.1} parent=1 // pred_fallthru
      _
    // Predicated region
    $region54: #{tpu_custom_call.1} parent=1 // pred_check
      _
    $region55: #{tpu_custom_call.1} parent=1 // pred_check_branch
      %118 = sbr.rel (0) target = $region57
    $region56: #{tpu_custom_call.1} parent=1 // pred_region
      %120 = dma.done [#allocation6], 2048
    $region57: #{tpu_custom_call.1} parent=1 // pred_fallthru
      _
    // Predicated region
    $region58: #{tpu_custom_call.1} parent=1 // pred_check
      _
    $region59: #{tpu_custom_call.1} parent=1 // pred_check_branch
      %122 = sbr.rel (0) target = $region61
    $region60: #{tpu_custom_call.1} parent=1 // pred_region
      %124 = dma.done [#allocation9], 2048
    $region61: #{tpu_custom_call.1} parent=1 // pred_fallthru
      _
    // Predicated region
    $region62: #{tpu_custom_call.1} parent=1 // pred_check
      _
    $region63: #{tpu_custom_call.1} parent=1 // pred_check_branch
      %126 = sbr.rel (0) target = $region65
    $region64: #{tpu_custom_call.1} parent=1 // pred_region
      %128 = dma.done [#allocation9], 2048
    $region65: #{tpu_custom_call.1} parent=1 // pred_fallthru
      _
    // Predicated region
    $region66: #{tpu_custom_call.1} parent=1 // pred_check
      _
    $region67: #{tpu_custom_call.1} parent=1 // pred_check_branch
      %130 = sbr.rel (0) target = $region69
    $region68: #{tpu_custom_call.1} parent=1 // pred_region
      %132 = dma.done [#allocation12], 2048
    $region69: #{tpu_custom_call.1} parent=1 // pred_fallthru
      _
    %v133 = vld [vmem:[#allocation2] sm:$0xff]
    %v134 = vld [vmem:[#allocation2 + $0x8] sm:$0xff]
    %v135 = vld [vmem:[#allocation5] sm:$0xff]
    %v136 = vld [vmem:[#allocation5 + $0x8] sm:$0xff]
    %v137 = vld [vmem:[#allocation5 + $0x10] sm:$0xff]
    %v138 = vld [vmem:[#allocation5 + $0x18] sm:$0xff]
    %v139 = vld [vmem:[%s2] sm:$0x1]
    %v141 = vperm.slane %v139, 0
    %vm143 = vcmask 261120
    %v145 = vsel %vm143, %v133, 0
    %v148 = vsel %vm143, %v134, 0
    %150 = vmatpush.msra.mxu0 0.0
    %151 = vmatpush.msra.mxu0 0.0
    %152 = vmatpush.msra.mxu0 0.0
    %153 = vmatpush.msra.mxu0 0.0
    %154 = vmatpush.msra.mxu0 0.0
    %155 = vmatpush.msra.mxu0 0.0
    %156 = vmatpush.msra.mxu0 0.0
    %157 = vmatpush.msra.mxu0 0.0
    %158 = vmatpush.msra.mxu0 0.0
    %159 = vmatpush.msra.mxu0 0.0
    %160 = vmatpush.msra.mxu0 0.0
    %161 = vmatpush.msra.mxu0 0.0
    %162 = vmatpush.msra.mxu0 %v138
    %163 = vmatpush.msra.mxu0 %v137
    %164 = vmatpush.msra.mxu0 %v136
    %165 = vmatpush.msra.mxu0 %v135
    %166 = vmatmul.f32.gmra.mxu0 %v145
    %v167 = vpop.f32.mrf.mxu0
    %v168 = vadd.f32 %v141, %v167
    %169 = vmatmul.f32.gmra.mxu0 %v148
    %v170 = vpop.f32.mrf.mxu0
    %v171 = vadd.f32 %v141, %v170
    %172 = vdwg.mxu0
    %v173 = vmax.f32 %v168, 0.0
    %v174 = vmax.f32 %v171, 0.0
    %v175 = vld [vmem:[#allocation7] sm:$0xff]
    %v176 = vld [vmem:[#allocation7 + $0x8] sm:$0xff]
    %v177 = vld [vmem:[#allocation7 + $0x10] sm:$0xff]
    %v178 = vld [vmem:[#allocation7 + $0x18] sm:$0xff]
    %v179 = vld [vmem:[#allocation7 + $0x20] sm:$0xff]
    %v180 = vld [vmem:[#allocation7 + $0x28] sm:$0xff]
    %v181 = vld [vmem:[#allocation7 + $0x30] sm:$0xff]
    %v182 = vld [vmem:[#allocation7 + $0x38] sm:$0xff]
    %v183 = vld [vmem:[#allocation7 + $0x40] sm:$0xff]
    %v184 = vld [vmem:[#allocation7 + $0x48] sm:$0xff]
    %v185 = vld [vmem:[#allocation7 + $0x50] sm:$0xff]
    %v186 = vld [vmem:[#allocation7 + $0x58] sm:$0xff]
    %v187 = vld [vmem:[#allocation7 + $0x60] sm:$0xff]
    %v188 = vld [vmem:[#allocation7 + $0x68] sm:$0xff]
    %v189 = vld [vmem:[#allocation7 + $0x70] sm:$0xff]
    %v190 = vld [vmem:[#allocation7 + $0x78] sm:$0xff]
    %v191 = vld [vmem:[%s4] sm:$0x1]
    %v193 = vperm.slane %v191, 0
    %195 = vmatpush.msra.mxu0 %v190
    %196 = vmatpush.msra.mxu0 %v189
    %197 = vmatpush.msra.mxu0 %v188
    %198 = vmatpush.msra.mxu0 %v187
    %199 = vmatpush.msra.mxu0 %v186
    %200 = vmatpush.msra.mxu0 %v185
    %201 = vmatpush.msra.mxu0 %v184
    %202 = vmatpush.msra.mxu0 %v183
    %203 = vmatpush.msra.mxu0 %v182
    %204 = vmatpush.msra.mxu0 %v181
    %205 = vmatpush.msra.mxu0 %v180
    %206 = vmatpush.msra.mxu0 %v179
    %207 = vmatpush.msra.mxu0 %v178
    %208 = vmatpush.msra.mxu0 %v177
    %209 = vmatpush.msra.mxu0 %v176
    %210 = vmatpush.msra.mxu0 %v175
    %211 = vmatmul.f32.gmra.mxu0 %v173
    %v212 = vpop.f32.mrf.mxu0
    %v213 = vadd.f32 %v193, %v212
    %214 = vmatmul.f32.gmra.mxu0 %v174
    %v215 = vpop.f32.mrf.mxu0
    %v216 = vadd.f32 %v193, %v215
    %217 = vdwg.mxu0
    %v218 = vmax.f32 %v213, 0.0
    %v219 = vmax.f32 %v216, 0.0
    %v220 = vld [vmem:[#allocation8] sm:$0xff]
    %v221 = vld [vmem:[#allocation8 + $0x8] sm:$0xff]
    %v222 = vld [vmem:[#allocation8 + $0x10] sm:$0xff]
    %v223 = vld [vmem:[#allocation8 + $0x18] sm:$0xff]
    %v224 = vld [vmem:[#allocation8 + $0x20] sm:$0xff]
    %v225 = vld [vmem:[#allocation8 + $0x28] sm:$0xff]
    %v226 = vld [vmem:[#allocation8 + $0x30] sm:$0xff]
    %v227 = vld [vmem:[#allocation8 + $0x38] sm:$0xff]
    %v228 = vld [vmem:[#allocation8 + $0x40] sm:$0xff]
    %v229 = vld [vmem:[#allocation8 + $0x48] sm:$0xff]
    %v230 = vld [vmem:[#allocation8 + $0x50] sm:$0xff]
    %v231 = vld [vmem:[#allocation8 + $0x58] sm:$0xff]
    %v232 = vld [vmem:[#allocation8 + $0x60] sm:$0xff]
    %v233 = vld [vmem:[#allocation8 + $0x68] sm:$0xff]
    %v234 = vld [vmem:[#allocation8 + $0x70] sm:$0xff]
    %v235 = vld [vmem:[#allocation8 + $0x78] sm:$0xff]
    %v236 = vld [vmem:[%s6] sm:$0x1]
    %v238 = vperm.slane %v236, 0
    %240 = vmatpush.msra.mxu0 %v235
    %241 = vmatpush.msra.mxu0 %v234
    %242 = vmatpush.msra.mxu0 %v233
    %243 = vmatpush.msra.mxu0 %v232
    %244 = vmatpush.msra.mxu0 %v231
    %245 = vmatpush.msra.mxu0 %v230
    %246 = vmatpush.msra.mxu0 %v229
    %247 = vmatpush.msra.mxu0 %v228
    %248 = vmatpush.msra.mxu0 %v227
    %249 = vmatpush.msra.mxu0 %v226
    %250 = vmatpush.msra.mxu0 %v225
    %251 = vmatpush.msra.mxu0 %v224
    %252 = vmatpush.msra.mxu0 %v223
    %253 = vmatpush.msra.mxu0 %v222
    %254 = vmatpush.msra.mxu0 %v221
    %255 = vmatpush.msra.mxu0 %v220
    %256 = vmatmul.f32.gmra.mxu0 %v218
    %v257 = vpop.f32.mrf.mxu0
    %v258 = vadd.f32 %v238, %v257
    %259 = vmatmul.f32.gmra.mxu0 %v219
    %v260 = vpop.f32.mrf.mxu0
    %v261 = vadd.f32 %v238, %v260
    %262 = vdwg.mxu0
    %v263 = vmax.f32 %v258, 0.0
    %v264 = vmax.f32 %v261, 0.0
    %v265 = vld [vmem:[#allocation10] sm:$0xff]
    %v266 = vld [vmem:[#allocation10 + $0x8] sm:$0xff]
    %v267 = vld [vmem:[#allocation10 + $0x10] sm:$0xff]
    %v268 = vld [vmem:[#allocation10 + $0x18] sm:$0xff]
    %v269 = vld [vmem:[#allocation10 + $0x20] sm:$0xff]
    %v270 = vld [vmem:[#allocation10 + $0x28] sm:$0xff]
    %v271 = vld [vmem:[#allocation10 + $0x30] sm:$0xff]
    %v272 = vld [vmem:[#allocation10 + $0x38] sm:$0xff]
    %v273 = vld [vmem:[#allocation10 + $0x40] sm:$0xff]
    %v274 = vld [vmem:[#allocation10 + $0x48] sm:$0xff]
    %v275 = vld [vmem:[#allocation10 + $0x50] sm:$0xff]
    %v276 = vld [vmem:[#allocation10 + $0x58] sm:$0xff]
    %v277 = vld [vmem:[#allocation10 + $0x60] sm:$0xff]
    %v278 = vld [vmem:[#allocation10 + $0x68] sm:$0xff]
    %v279 = vld [vmem:[#allocation10 + $0x70] sm:$0xff]
    %v280 = vld [vmem:[#allocation10 + $0x78] sm:$0xff]
    %v281 = vld [vmem:[%s8] sm:$0x1]
    %v283 = vperm.slane %v281, 0
    %285 = vmatpush.msra.mxu0 %v280
    %286 = vmatpush.msra.mxu0 %v279
    %287 = vmatpush.msra.mxu0 %v278
    %288 = vmatpush.msra.mxu0 %v277
    %289 = vmatpush.msra.mxu0 %v276
    %290 = vmatpush.msra.mxu0 %v275
    %291 = vmatpush.msra.mxu0 %v274
    %292 = vmatpush.msra.mxu0 %v273
    %293 = vmatpush.msra.mxu0 %v272
    %294 = vmatpush.msra.mxu0 %v271
    %295 = vmatpush.msra.mxu0 %v270
    %296 = vmatpush.msra.mxu0 %v269
    %297 = vmatpush.msra.mxu0 %v268
    %298 = vmatpush.msra.mxu0 %v267
    %299 = vmatpush.msra.mxu0 %v266
    %300 = vmatpush.msra.mxu0 %v265
    %301 = vmatmul.f32.gmra.mxu0 %v263
    %v302 = vpop.f32.mrf.mxu0
    %v303 = vadd.f32 %v283, %v302
    %304 = vmatmul.f32.gmra.mxu0 %v264
    %v305 = vpop.f32.mrf.mxu0
    %v306 = vadd.f32 %v283, %v305
    %307 = vdwg.mxu0
    %v308 = vmax.f32 %v303, 0.0
    %v309 = vmax.f32 %v306, 0.0
    %v310 = vld [vmem:[#allocation11] sm:$0xff]
    %v311 = vld [vmem:[#allocation11 + $0x8] sm:$0xff]
    %v312 = vld [vmem:[#allocation11 + $0x10] sm:$0xff]
    %v313 = vld [vmem:[#allocation11 + $0x18] sm:$0xff]
    %v314 = vld [vmem:[#allocation11 + $0x20] sm:$0xff]
    %v315 = vld [vmem:[#allocation11 + $0x28] sm:$0xff]
    %v316 = vld [vmem:[#allocation11 + $0x30] sm:$0xff]
    %v317 = vld [vmem:[#allocation11 + $0x38] sm:$0xff]
    %v318 = vld [vmem:[#allocation11 + $0x40] sm:$0xff]
    %v319 = vld [vmem:[#allocation11 + $0x48] sm:$0xff]
    %v320 = vld [vmem:[#allocation11 + $0x50] sm:$0xff]
    %v321 = vld [vmem:[#allocation11 + $0x58] sm:$0xff]
    %v322 = vld [vmem:[#allocation11 + $0x60] sm:$0xff]
    %v323 = vld [vmem:[#allocation11 + $0x68] sm:$0xff]
    %v324 = vld [vmem:[#allocation11 + $0x70] sm:$0xff]
    %v325 = vld [vmem:[#allocation11 + $0x78] sm:$0xff]
    %v326 = vld [vmem:[%s10] sm:$0x1]
    %v328 = vperm.slane %v326, 0
    %330 = vmatpush.msra.mxu0 %v325
    %331 = vmatpush.msra.mxu0 %v324
    %332 = vmatpush.msra.mxu0 %v323
    %333 = vmatpush.msra.mxu0 %v322
    %334 = vmatpush.msra.mxu0 %v321
    %335 = vmatpush.msra.mxu0 %v320
    %336 = vmatpush.msra.mxu0 %v319
    %337 = vmatpush.msra.mxu0 %v318
    %338 = vmatpush.msra.mxu0 %v317
    %339 = vmatpush.msra.mxu0 %v316
    %340 = vmatpush.msra.mxu0 %v315
    %341 = vmatpush.msra.mxu0 %v314
    %342 = vmatpush.msra.mxu0 %v313
    %343 = vmatpush.msra.mxu0 %v312
    %344 = vmatpush.msra.mxu0 %v311
    %345 = vmatpush.msra.mxu0 %v310
    %346 = vmatmul.f32.gmra.mxu0 %v308
    %v347 = vpop.f32.mrf.mxu0
    %v348 = vadd.f32 %v328, %v347
    %349 = vmatmul.f32.gmra.mxu0 %v309
    %v350 = vpop.f32.mrf.mxu0
    %v351 = vadd.f32 %v328, %v350
    %352 = vdwg.mxu0
    %v353 = vtanh.pop %v348
    %v354 = vtanh.pop %v351
    %355 = vst [vmem:[#allocation13] sm:$0xff] %v353
    %356 = vst [vmem:[#allocation13 + $0x8] sm:$0xff] %v354
    // Predicated region
    $region70: #{tpu_custom_call.1} parent=1 // pred_check
      _
    $region71: #{tpu_custom_call.1} parent=1 // pred_check_branch
      %358 = sbr.rel (0) target = $region73
    $region72: #{tpu_custom_call.1} parent=1 // pred_region
      %360 = vsyncadd [#allocation4], 0
      %s361 = sshll.u32 [#allocation13], 4
      %s362 = int_to_ptr.vmem [resolvable:$true] %s361
      %s363 = sshll.u32 %s11, 4
      %s364 = int_to_ptr.hbm [resolvable:$true] %s363
      %369 = dma.vmem_to_hbm [thread:$0]  %s362, 256, %s364, [#allocation4], 128, 128, 8
    $region73: #{tpu_custom_call.1} parent=1 // pred_fallthru
      _
    // Predicated region
    $region74: #{tpu_custom_call.1} parent=1 // pred_check
      _
    $region75: #{tpu_custom_call.1} parent=1 // pred_check_branch
      %371 = sbr.rel (0) target = $region77
    $region76: #{tpu_custom_call.1} parent=1 // pred_region
      %373 = dma.done [#allocation4], 256
    $region77: #{tpu_custom_call.1} parent=1 // pred_fallthru
      _
    %374 = vsyncpa [#allocation3], 1
    %375 = vsyncpa [#allocation6], 1
    %376 = vsyncpa [#allocation9], 1
    %377 = vsyncpa [#allocation12], 1
    %378 = vsyncpa [#allocation4], 1

</llo_original>
